<compile_context>
chip_gen: v6e
topology: v6e:2x2x1
jax: 0.10.0
libtpu: 0.0.40
codegen_flags: <defaults>
</compile_context>

<pallas_src>
import jax
import jax.numpy as jnp
from jax.experimental import pallas as pl
from jax.experimental.pallas import tpu as pltpu


LANE = 128      # lane width (last-dim alignment)


def _round_up(n, m):
    return ((n + m - 1) // m) * m


def mlp_kernel(x_ref,
               w1_ref, b1_ref,
               w2_ref, b2_ref,
               w3_ref, b3_ref,
               w4_ref, b4_ref,
               o_ref):
    """Whole forward pass for one batch tile: 4 matmuls + biases + ReLUs."""
    # x may stream in as bf16 (HBM-bound path); compute/accumulate in f32.
    x = x_ref[...].astype(jnp.float32)

    h = jnp.dot(x, w1_ref[...], preferred_element_type=jnp.float32) + b1_ref[...]
    h = jnp.maximum(h, 0.0)

    h = jnp.dot(h, w2_ref[...], preferred_element_type=jnp.float32) + b2_ref[...]
    h = jnp.maximum(h, 0.0)

    h = jnp.dot(h, w3_ref[...], preferred_element_type=jnp.float32) + b3_ref[...]
    h = jnp.maximum(h, 0.0)

    h = jnp.dot(h, w4_ref[...], preferred_element_type=jnp.float32) + b4_ref[...]

    # Narrow (tile, 10) store: masked vst, but 12.8x less HBM write traffic
    # than a 128-wide padded output.
    o_ref[...] = h.astype(o_ref.dtype)


def _pad_params(params):
    """Pad hidden dims to 128 lanes; keep x's in-dim and the 10-wide out unpadded.

    Resulting shapes: w1 (D,128) b1 (1,128); w2 (128,128) b2 (1,128);
    w3 (128,128) b3 (1,128); w4 (128,10) b4 (1,10).  Zero padding + ReLU(0)=0
    keeps the math exactly equal to the unpadded network.
    """
    def pad(w, b, pad_in, pad_out):
        fi, fo = w.shape
        fi_p = _round_up(fi, LANE) if pad_in else fi
        fo_p = _round_up(fo, LANE) if pad_out else fo
        w_p = jnp.zeros((fi_p, fo_p), jnp.float32).at[:fi, :fo].set(
            w.astype(jnp.float32))
        b_p = jnp.zeros((1, fo_p), jnp.float32).at[:, :fo].set(
            b.reshape(1, -1).astype(jnp.float32))
        return w_p, b_p

    (w1, b1), (w2, b2), (w3, b3), (w4, b4) = params
    return [
        pad(w1, b1, pad_in=False, pad_out=True),   # x streams at real width D
        pad(w2, b2, pad_in=True,  pad_out=True),
        pad(w3, b3, pad_in=True,  pad_out=True),
        pad(w4, b4, pad_in=True,  pad_out=False),  # keep the output 10-wide
    ]


def network_forward(x, params, *, max_batch_tile=2048, batch_tile=None,
                    x_dtype=None):
    """Run the MLP with a 1-D parallel grid over the batch dimension.

    x streams through the pipeline untouched (no padded HBM copy); weights and
    biases use constant index_maps so they stay VMEM-resident across steps.
    Output is the unpadded (B, 10) array.  Set x_dtype=jnp.bfloat16 to halve
    the dominant HBM read (accumulation stays f32; ~bf16-level tolerance).
    """
    B, D = x.shape
    (w1, b1), (w2, b2), (w3, b3), (w4, b4) = _pad_params(params)
    assert w1.shape[0] == D, "x feature dim must match dense1 fan_in"
    out_dim = w4.shape[1]

    if x_dtype is not None and x.dtype != x_dtype:
        x = x.astype(x_dtype)
    # Sub-32-bit dtypes pack along sublanes -> keep multi-step tiles 16-aligned.
    sub = 16 if jnp.dtype(x.dtype).itemsize < 4 else 8

    if batch_tile is None:
        if B <= 256:
            # Single full-batch block: dims equal the array dims, so exempt
            # from (8,128) alignment; per-step overhead dominates below this.
            batch_tile = B
        elif B <= 2 * max_batch_tile:
            # >=2 grid steps so the "parallel" axis can shard across both
            # v7x TensorCores.
            batch_tile = _round_up(pl.cdiv(B, 2), sub)
        else:
            batch_tile = max_batch_tile

    # Ragged last tile: OOB input rows are garbage but only affect OOB output
    # rows, whose stores are dropped -- no whole-tile batch padding needed.
    grid = (pl.cdiv(B, batch_tile),)

    def resident(arr):
        # Same block every grid step -> stays VMEM-resident.
        # TODO(synk): pipeline_mode=pl.Buffered(1) would halve these buffers'
        # (~170 KiB) footprint; omitted as negligible here.
        return pl.BlockSpec(arr.shape, lambda i: (0, 0))

    out = pl.pallas_call(
        mlp_kernel,
        out_shape=jax.ShapeDtypeStruct((B, out_dim), jnp.float32),
        grid_spec=pltpu.PrefetchScalarGridSpec(
            num_scalar_prefetch=0,
            grid=grid,
            in_specs=[
                pl.BlockSpec((batch_tile, D), lambda i: (i, 0)),
                resident(w1), resident(b1),
                resident(w2), resident(b2),
                resident(w3), resident(b3),
                resident(w4), resident(b4),
            ],
            out_specs=pl.BlockSpec((batch_tile, out_dim), lambda i: (i, 0)),
        ),
        compiler_params=pltpu.CompilerParams(
            dimension_semantics=("parallel",),
            vmem_limit_bytes=32 * 1024 * 1024,
        ),
    )(x, w1, b1, w2, b2, w3, b3, w4, b4)
    return out


def init_params(key, history_length):
    """Deterministic init mimicking nn.Linear's U(-1/sqrt(fan_in), 1/sqrt(fan_in)).

    Weights stored as (fan_in, fan_out) = PyTorch weight.T; biases as (1, fan_out).
    """
    in_dim = 10 * (history_length + 1) + 3 * history_length
    dims = [(in_dim, 100), (100, 100), (100, 50), (50, 10)]
    params = []
    for (fan_in, fan_out) in dims:
        key, kw, kb = jax.random.split(key, 3)
        bound = 1.0 / (fan_in ** 0.5)
        w = jax.random.uniform(kw, (fan_in, fan_out), jnp.float32, -bound, bound)
        b = jax.random.uniform(kb, (1, fan_out), jnp.float32, -bound, bound)
        params.append((w, b))
    return params, in_dim


def reference_forward(x, params):
    """Pure-JAX reference of the PyTorch forward."""
    (w1, b1), (w2, b2), (w3, b3), (w4, b4) = params
    h = jnp.maximum(x @ w1 + b1, 0.0)
    h = jnp.maximum(h @ w2 + b2, 0.0)
    h = jnp.maximum(h @ w3 + b3, 0.0)
    return h @ w4 + b4


if __name__ == "__main__":
    history_length = 4            # in_dim = 10*5 + 3*4 = 62
    batch = 16

    key = jax.random.PRNGKey(0)
    params, in_dim = init_params(key, history_length)

    key, kx = jax.random.split(key)
    x = jax.random.normal(kx, (batch, in_dim), jnp.float32)
    ref = reference_forward(x, params)

    # 1) Default f32 input stream (tight tolerance; default MXU precision
    #    is bf16-pass, hence 1e-4 rather than bit-exactness).
    out = jax.block_until_ready(network_forward(x, params))
    assert out.shape == (batch, 10)
    assert jnp.allclose(out, ref, atol=1e-4, rtol=1e-4)

    # 2) bf16 input stream (halves dominant HBM read on v5e/v6e/v7x);
    #    accumulation stays f32, so only x quantization error remains.
    out_bf = jax.block_until_ready(
        network_forward(x, params, x_dtype=jnp.bfloat16))
    assert out_bf.shape == (batch, 10)
    assert jnp.allclose(out_bf, ref, atol=5e-2, rtol=5e-2)

    # 3) Multi-step grid with a ragged last tile (forced tiny tile).
    key, kx2 = jax.random.split(key)
    x2 = jax.random.normal(kx2, (20, in_dim), jnp.float32)
    out2 = jax.block_until_ready(network_forward(x2, params, batch_tile=8))
    assert out2.shape == (20, 10)
    assert jnp.allclose(out2, reference_forward(x2, params),
                        atol=1e-4, rtol=1e-4)

    print("KERNEL_OK")
</pallas_src>

<mosaic_0001>
module attributes {stable_mosaic.version = 11 : i64} {
  func.func @mlp_kernel(%arg0: i32, %arg1: memref<16x62xf32, #tpu.memory_space<vmem>>, %arg2: memref<62x128xf32, #tpu.memory_space<vmem>>, %arg3: memref<1x128xf32, #tpu.memory_space<vmem>>, %arg4: memref<128x128xf32, #tpu.memory_space<vmem>>, %arg5: memref<1x128xf32, #tpu.memory_space<vmem>>, %arg6: memref<128x128xf32, #tpu.memory_space<vmem>>, %arg7: memref<1x128xf32, #tpu.memory_space<vmem>>, %arg8: memref<128x10xf32, #tpu.memory_space<vmem>>, %arg9: memref<1x10xf32, #tpu.memory_space<vmem>>, %arg10: memref<16x10xf32, #tpu.memory_space<vmem>>) attributes {dimension_semantics = [#tpu.dimension_semantics<parallel>], iteration_bounds = array<i64: 1>, scalar_prefetch = 0 : i64, scratch_operands = 0 : i64, tpu.core_type = #tpu.core_type<tc>, window_params = [{transform_indices = @transform_0, window_bounds = array<i64: 16, 62>}, {pipeline_mode = #tpu.pipeline_mode<synchronous>, transform_indices = @transform_1, window_bounds = array<i64: 62, 128>}, {pipeline_mode = #tpu.pipeline_mode<synchronous>, transform_indices = @transform_2, window_bounds = array<i64: 1, 128>}, {pipeline_mode = #tpu.pipeline_mode<synchronous>, transform_indices = @transform_3, window_bounds = array<i64: 128, 128>}, {pipeline_mode = #tpu.pipeline_mode<synchronous>, transform_indices = @transform_4, window_bounds = array<i64: 1, 128>}, {pipeline_mode = #tpu.pipeline_mode<synchronous>, transform_indices = @transform_5, window_bounds = array<i64: 128, 128>}, {pipeline_mode = #tpu.pipeline_mode<synchronous>, transform_indices = @transform_6, window_bounds = array<i64: 1, 128>}, {pipeline_mode = #tpu.pipeline_mode<synchronous>, transform_indices = @transform_7, window_bounds = array<i64: 128, 10>}, {pipeline_mode = #tpu.pipeline_mode<synchronous>, transform_indices = @transform_8, window_bounds = array<i64: 1, 10>}, {transform_indices = @transform_9, window_bounds = array<i64: 16, 10>}]} {
    %c0 = arith.constant 0 : index
    %c0_0 = arith.constant 0 : index
    %0 = vector.load %arg1[%c0, %c0_0] : memref<16x62xf32, #tpu.memory_space<vmem>>, vector<16x62xf32>
    %c0_1 = arith.constant 0 : index
    %c0_2 = arith.constant 0 : index
    %1 = vector.load %arg2[%c0_1, %c0_2] : memref<62x128xf32, #tpu.memory_space<vmem>>, vector<62x128xf32>
    %cst = arith.constant dense<0.000000e+00> : vector<16x128xf32>
    %2 = tpu.matmul %0, %1, %cst {dimension_numbers = #tpu.dot_dimension_numbers<[1], [0], [0], [1], [0, 0, 1, 1], [], []>} : vector<16x62xf32>, vector<62x128xf32>, vector<16x128xf32> -> vector<16x128xf32>
    %c0_3 = arith.constant 0 : index
    %c0_4 = arith.constant 0 : index
    %3 = vector.load %arg3[%c0_3, %c0_4] : memref<1x128xf32, #tpu.memory_space<vmem>>, vector<1x128xf32>
    %4 = vector.broadcast %3 : vector<1x128xf32> to vector<16x128xf32>
    %5 = arith.addf %2, %4 : vector<16x128xf32>
    %cst_5 = arith.constant 0.000000e+00 : f32
    %6 = vector.broadcast %cst_5 : f32 to vector<16x128xf32>
    %7 = arith.maximumf %5, %6 : vector<16x128xf32>
    %c0_6 = arith.constant 0 : index
    %c0_7 = arith.constant 0 : index
    %8 = vector.load %arg4[%c0_6, %c0_7] : memref<128x128xf32, #tpu.memory_space<vmem>>, vector<128x128xf32>
    %cst_8 = arith.constant dense<0.000000e+00> : vector<16x128xf32>
    %9 = tpu.matmul %7, %8, %cst_8 {dimension_numbers = #tpu.dot_dimension_numbers<[1], [0], [0], [1], [0, 0, 1, 1], [], []>} : vector<16x128xf32>, vector<128x128xf32>, vector<16x128xf32> -> vector<16x128xf32>
    %c0_9 = arith.constant 0 : index
    %c0_10 = arith.constant 0 : index
    %10 = vector.load %arg5[%c0_9, %c0_10] : memref<1x128xf32, #tpu.memory_space<vmem>>, vector<1x128xf32>
    %11 = vector.broadcast %10 : vector<1x128xf32> to vector<16x128xf32>
    %12 = arith.addf %9, %11 : vector<16x128xf32>
    %cst_11 = arith.constant 0.000000e+00 : f32
    %13 = vector.broadcast %cst_11 : f32 to vector<16x128xf32>
    %14 = arith.maximumf %12, %13 : vector<16x128xf32>
    %c0_12 = arith.constant 0 : index
    %c0_13 = arith.constant 0 : index
    %15 = vector.load %arg6[%c0_12, %c0_13] : memref<128x128xf32, #tpu.memory_space<vmem>>, vector<128x128xf32>
    %cst_14 = arith.constant dense<0.000000e+00> : vector<16x128xf32>
    %16 = tpu.matmul %14, %15, %cst_14 {dimension_numbers = #tpu.dot_dimension_numbers<[1], [0], [0], [1], [0, 0, 1, 1], [], []>} : vector<16x128xf32>, vector<128x128xf32>, vector<16x128xf32> -> vector<16x128xf32>
    %c0_15 = arith.constant 0 : index
    %c0_16 = arith.constant 0 : index
    %17 = vector.load %arg7[%c0_15, %c0_16] : memref<1x128xf32, #tpu.memory_space<vmem>>, vector<1x128xf32>
    %18 = vector.broadcast %17 : vector<1x128xf32> to vector<16x128xf32>
    %19 = arith.addf %16, %18 : vector<16x128xf32>
    %cst_17 = arith.constant 0.000000e+00 : f32
    %20 = vector.broadcast %cst_17 : f32 to vector<16x128xf32>
    %21 = arith.maximumf %19, %20 : vector<16x128xf32>
    %c0_18 = arith.constant 0 : index
    %c0_19 = arith.constant 0 : index
    %22 = vector.load %arg8[%c0_18, %c0_19] : memref<128x10xf32, #tpu.memory_space<vmem>>, vector<128x10xf32>
    %cst_20 = arith.constant dense<0.000000e+00> : vector<16x10xf32>
    %23 = tpu.matmul %21, %22, %cst_20 {dimension_numbers = #tpu.dot_dimension_numbers<[1], [0], [0], [1], [0, 0, 1, 1], [], []>} : vector<16x128xf32>, vector<128x10xf32>, vector<16x10xf32> -> vector<16x10xf32>
    %c0_21 = arith.constant 0 : index
    %c0_22 = arith.constant 0 : index
    %24 = vector.load %arg9[%c0_21, %c0_22] : memref<1x10xf32, #tpu.memory_space<vmem>>, vector<1x10xf32>
    %25 = vector.broadcast %24 : vector<1x10xf32> to vector<16x10xf32>
    %26 = arith.addf %23, %25 : vector<16x10xf32>
    %c0_23 = arith.constant 0 : index
    %c0_24 = arith.constant 0 : index
    %27 = vector.load %arg10[%c0_23, %c0_24] : memref<16x10xf32, #tpu.memory_space<vmem>>, vector<16x10xf32>
    tpu.vector_store %arg10[%c0_23, %c0_24], %26 {strides = array<i32>} : memref<16x10xf32, #tpu.memory_space<vmem>>, vector<16x10xf32>,
    return
  }
  func.func @transform_0(%arg0: i32) -> (i32, i32) {
    %c0_i32 = arith.constant 0 : i32
    %c0_i32_0 = arith.constant 0 : i32
    return %arg0, %c0_i32 : i32, i32
  }
  func.func @transform_1(%arg0: i32) -> (i32, i32) {
    %c0_i32 = arith.constant 0 : i32
    %c0_i32_0 = arith.constant 0 : i32
    %c0_i32_1 = arith.constant 0 : i32
    return %c0_i32, %c0_i32_0 : i32, i32
  }
  func.func @transform_2(%arg0: i32) -> (i32, i32) {
    %c0_i32 = arith.constant 0 : i32
    %c0_i32_0 = arith.constant 0 : i32
    %c0_i32_1 = arith.constant 0 : i32
    return %c0_i32, %c0_i32_0 : i32, i32
  }
  func.func @transform_3(%arg0: i32) -> (i32, i32) {
    %c0_i32 = arith.constant 0 : i32
    %c0_i32_0 = arith.constant 0 : i32
    %c0_i32_1 = arith.constant 0 : i32
    return %c0_i32, %c0_i32_0 : i32, i32
  }
  func.func @transform_4(%arg0: i32) -> (i32, i32) {
    %c0_i32 = arith.constant 0 : i32
    %c0_i32_0 = arith.constant 0 : i32
    %c0_i32_1 = arith.constant 0 : i32
    return %c0_i32, %c0_i32_0 : i32, i32
  }
  func.func @transform_5(%arg0: i32) -> (i32, i32) {
    %c0_i32 = arith.constant 0 : i32
    %c0_i32_0 = arith.constant 0 : i32
    %c0_i32_1 = arith.constant 0 : i32
    return %c0_i32, %c0_i32_0 : i32, i32
  }
  func.func @transform_6(%arg0: i32) -> (i32, i32) {
    %c0_i32 = arith.constant 0 : i32
    %c0_i32_0 = arith.constant 0 : i32
    %c0_i32_1 = arith.constant 0 : i32
    return %c0_i32, %c0_i32_0 : i32, i32
  }
  func.func @transform_7(%arg0: i32) -> (i32, i32) {
    %c0_i32 = arith.constant 0 : i32
    %c0_i32_0 = arith.constant 0 : i32
    %c0_i32_1 = arith.constant 0 : i32
    return %c0_i32, %c0_i32_0 : i32, i32
  }
  func.func @transform_8(%arg0: i32) -> (i32, i32) {
    %c0_i32 = arith.constant 0 : i32
    %c0_i32_0 = arith.constant 0 : i32
    %c0_i32_1 = arith.constant 0 : i32
    return %c0_i32, %c0_i32_0 : i32, i32
  }
  func.func @transform_9(%arg0: i32) -> (i32, i32) {
    %c0_i32 = arith.constant 0 : i32
    %c0_i32_0 = arith.constant 0 : i32
    return %arg0, %c0_i32 : i32, i32
  }
}

</mosaic_0001>

<llo_original>
// kernel: tpu_custom_call.1
$region0: #{tpu_custom_call.1}
  #allocation0 [shape = 'u32[]', space=smem, size = 0x4, offset = 0x4, fixed_abs, tag = 'smem constant byte address 0x4 - core index']
  #allocation1 [shape = 'u32[144,128]{1,0:T(1,128)}', space=vmem, size = 0x12000, scoped, tag = 'internal scratch']
  %s0 = inlined_call_operand.vmem [shape: f32[16,62], index: 0, kind: input, shape index: {}]
  %s1 = inlined_call_operand.hbm [shape: f32[62,128], index: 1, kind: input, shape index: {}]
  %s2 = inlined_call_operand.vmem [shape: f32[1,128], index: 2, kind: input, shape index: {}]
  %s3 = inlined_call_operand.vmem [shape: f32[128,128], index: 3, kind: input, shape index: {}]
  %s4 = inlined_call_operand.vmem [shape: f32[1,128], index: 4, kind: input, shape index: {}]
  %s5 = inlined_call_operand.hbm [shape: f32[128,128], index: 5, kind: input, shape index: {}]
  %s6 = inlined_call_operand.vmem [shape: f32[1,128], index: 6, kind: input, shape index: {}]
  %s7 = inlined_call_operand.vmem [shape: f32[128,10], index: 7, kind: input, shape index: {}]
  %s8 = inlined_call_operand.vmem [shape: f32[1,10], index: 8, kind: input, shape index: {}]
  %s9 = inlined_call_operand.hbm [shape: f32[16,10], index: 9, kind: output, shape index: {}]
  %s10 = sld [smem:[#allocation0]]
  $region54: #{tpu_custom_call.1} parent=0
    _
  %s12 = ssub.s32 1, %s10
  %s13 = scalar_select 0, %s12, %s10
  $region1: #{tpu_custom_call.1} parent=0
    #allocation2 [shape = 'u8[32768]{0}', space=vmem, size = 0x8000, scoped, tag = 'input window, operand 1, single buffered']
    #allocation3 [shape = 's32[1]{0}', space=sflag, size = 0x4, scoped, tag = 'scoped memory for tpu_custom_call.1']
    #allocation4 [shape = 's32[1]{0}', space=sflag, size = 0x4, scoped, tag = 'scoped memory for tpu_custom_call.1']
    #allocation5 [shape = 'u8[65536]{0}', space=vmem, size = 0x10000, scoped, tag = 'input window, operand 5, single buffered']
    #allocation6 [shape = 's32[1]{0}', space=sflag, size = 0x4, scoped, tag = 'scoped memory for tpu_custom_call.1']
    #allocation7 [shape = 'u8[8192]{0}', space=vmem, size = 0x2000, scoped, tag = 'output window, operand 0, single buffered']
    %14 = vsyncpa [#allocation3], 0
    %15 = vsyncpa [#allocation6], 0
    %16 = vsyncpa [#allocation4], 0
    // Predicated region
    $region2: #{tpu_custom_call.1} parent=1 // pred_check
      _
    $region3: #{tpu_custom_call.1} parent=1 // pred_check_branch
      %18 = sbr.rel (0) target = $region5
    $region4: #{tpu_custom_call.1} parent=1 // pred_region
      _
    $region5: #{tpu_custom_call.1} parent=1 // pred_fallthru
      _
    // Predicated region
    $region6: #{tpu_custom_call.1} parent=1 // pred_check
      _
    $region7: #{tpu_custom_call.1} parent=1 // pred_check_branch
      %20 = sbr.rel (0) target = $region9
    $region8: #{tpu_custom_call.1} parent=1 // pred_region
      %s22 = ssub.s32 1024, 1024
      %23 = vsyncadd [#allocation3], %s22
      %s24 = sshll.u32 [#allocation2], 4
      %s25 = int_to_ptr.vmem [resolvable:$true] %s24
      %30 = dma.hbm_to_vmem [thread:$0]  %s1, 1024, %s25, [#allocation3], 128, 128, 8
    $region9: #{tpu_custom_call.1} parent=1 // pred_fallthru
      _
    // Predicated region
    $region10: #{tpu_custom_call.1} parent=1 // pred_check
      _
    $region11: #{tpu_custom_call.1} parent=1 // pred_check_branch
      %32 = sbr.rel (0) target = $region13
    $region12: #{tpu_custom_call.1} parent=1 // pred_region
      _
    $region13: #{tpu_custom_call.1} parent=1 // pred_fallthru
      _
    // Predicated region
    $region14: #{tpu_custom_call.1} parent=1 // pred_check
      _
    $region15: #{tpu_custom_call.1} parent=1 // pred_check_branch
      %34 = sbr.rel (0) target = $region17
    $region16: #{tpu_custom_call.1} parent=1 // pred_region
      _
    $region17: #{tpu_custom_call.1} parent=1 // pred_fallthru
      _
    // Predicated region
    $region18: #{tpu_custom_call.1} parent=1 // pred_check
      _
    $region19: #{tpu_custom_call.1} parent=1 // pred_check_branch
      %36 = sbr.rel (0) target = $region21
    $region20: #{tpu_custom_call.1} parent=1 // pred_region
      _
    $region21: #{tpu_custom_call.1} parent=1 // pred_fallthru
      _
    // Predicated region
    $region22: #{tpu_custom_call.1} parent=1 // pred_check
      _
    $region23: #{tpu_custom_call.1} parent=1 // pred_check_branch
      %38 = sbr.rel (0) target = $region25
    $region24: #{tpu_custom_call.1} parent=1 // pred_region
      %s40 = ssub.s32 2048, 2048
      %41 = vsyncadd [#allocation6], %s40
      %s42 = sshll.u32 [#allocation5], 4
      %s43 = int_to_ptr.vmem [resolvable:$true] %s42
      %48 = dma.hbm_to_vmem [thread:$0]  %s5, 2048, %s43, [#allocation6], 128, 128, 8
    $region25: #{tpu_custom_call.1} parent=1 // pred_fallthru
      _
    // Predicated region
    $region26: #{tpu_custom_call.1} parent=1 // pred_check
      _
    $region27: #{tpu_custom_call.1} parent=1 // pred_check_branch
      %50 = sbr.rel (0) target = $region29
    $region28: #{tpu_custom_call.1} parent=1 // pred_region
      _
    $region29: #{tpu_custom_call.1} parent=1 // pred_fallthru
      _
    // Predicated region
    $region30: #{tpu_custom_call.1} parent=1 // pred_check
      _
    $region31: #{tpu_custom_call.1} parent=1 // pred_check_branch
      %52 = sbr.rel (0) target = $region33
    $region32: #{tpu_custom_call.1} parent=1 // pred_region
      _
    $region33: #{tpu_custom_call.1} parent=1 // pred_fallthru
      _
    // Predicated region
    $region34: #{tpu_custom_call.1} parent=1 // pred_check
      _
    $region35: #{tpu_custom_call.1} parent=1 // pred_check_branch
      %54 = sbr.rel (0) target = $region37
    $region36: #{tpu_custom_call.1} parent=1 // pred_region
      _
    $region37: #{tpu_custom_call.1} parent=1 // pred_fallthru
      _
    // Predicated region
    $region38: #{tpu_custom_call.1} parent=1 // pred_check
      _
    $region39: #{tpu_custom_call.1} parent=1 // pred_check_branch
      %56 = sbr.rel (0) target = $region41
    $region40: #{tpu_custom_call.1} parent=1 // pred_region
      %57 = dma.done [#allocation3], 1024
    $region41: #{tpu_custom_call.1} parent=1 // pred_fallthru
      _
    // Predicated region
    $region42: #{tpu_custom_call.1} parent=1 // pred_check
      _
    $region43: #{tpu_custom_call.1} parent=1 // pred_check_branch
      %59 = sbr.rel (0) target = $region45
    $region44: #{tpu_custom_call.1} parent=1 // pred_region
      %60 = dma.done [#allocation6], 2048
    $region45: #{tpu_custom_call.1} parent=1 // pred_fallthru
      _
    %v61 = vld [vmem:[%s0] sm:$0xff]
    %v62 = vld [vmem:[%s0 + $0x8] sm:$0xff]
    %v63 = vld [vmem:[#allocation2] sm:$0xff]
    %v64 = vld [vmem:[#allocation2 + $0x8] sm:$0xff]
    %v65 = vld [vmem:[#allocation2 + $0x10] sm:$0xff]
    %v66 = vld [vmem:[#allocation2 + $0x18] sm:$0xff]
    %v67 = vld [vmem:[#allocation2 + $0x20] sm:$0xff]
    %v68 = vld [vmem:[#allocation2 + $0x28] sm:$0xff]
    %v69 = vld [vmem:[#allocation2 + $0x30] sm:$0xff]
    %v70 = vld [vmem:[#allocation2 + $0x38] sm:$0x3f]
    %v71 = vld [vmem:[%s2] sm:$0x1]
    %v73 = vlaneseq
    %v74 = vshrl.u32 %v73, 7
    %v75 = vsub.s32 0, %v74
    %v76 = vrot.slane %v71, %v75
    %vm78 = vcmask 506880
    %v80 = vsel %vm78, %v61, 0
    %v83 = vsel %vm78, %v62, 0
    %vm85 = vcmask 1045504
    %v87 = vsel %vm85, %v70, 0
    %89 = vmatprep.subr.mxu0 0.0
    %90 = vmatpush1.msra.mxu0 0.0
    %91 = vmatprep.subr.mxu0 0.0
    %92 = vmatpush1.msra.mxu0 0.0
    %93 = vmatprep.subr.mxu0 0.0
    %94 = vmatpush1.msra.mxu0 0.0
    %95 = vmatprep.subr.mxu0 0.0
    %96 = vmatpush1.msra.mxu0 0.0
    %97 = vmatprep.subr.mxu0 0.0
    %98 = vmatpush1.msra.mxu0 0.0
    %99 = vmatprep.subr.mxu0 0.0
    %100 = vmatpush1.msra.mxu0 0.0
    %101 = vmatprep.subr.mxu0 0.0
    %102 = vmatpush1.msra.mxu0 0.0
    %103 = vmatprep.subr.mxu0 0.0
    %104 = vmatpush1.msra.mxu0 0.0
    %105 = vmatprep.subr.mxu0 0.0
    %106 = vmatpush1.msra.mxu0 %v87
    %107 = vmatprep.subr.mxu0 0.0
    %108 = vmatpush1.msra.mxu0 %v69
    %109 = vmatprep.subr.mxu0 0.0
    %110 = vmatpush1.msra.mxu0 %v68
    %111 = vmatprep.subr.mxu0 0.0
    %112 = vmatpush1.msra.mxu0 %v67
    %113 = vmatprep.subr.mxu0 0.0
    %114 = vmatpush1.msra.mxu0 %v66
    %115 = vmatprep.subr.mxu0 0.0
    %116 = vmatpush1.msra.mxu0 %v65
    %117 = vmatprep.subr.mxu0 0.0
    %118 = vmatpush1.msra.mxu0 %v64
    %119 = vmatprep.subr.mxu0 0.0
    %120 = vmatpush1.msra.mxu0 %v63
    %121 = vmatprep.subr.mxu0 0.0
    %122 = vmatpush2.msra.mxu0 0.0
    %123 = vmatprep.subr.mxu0 0.0
    %124 = vmatpush2.msra.mxu0 0.0
    %125 = vmatprep.subr.mxu0 0.0
    %126 = vmatpush2.msra.mxu0 0.0
    %127 = vmatprep.subr.mxu0 0.0
    %128 = vmatpush2.msra.mxu0 0.0
    %129 = vmatprep.subr.mxu0 0.0
    %130 = vmatpush2.msra.mxu0 0.0
    %131 = vmatprep.subr.mxu0 0.0
    %132 = vmatpush2.msra.mxu0 0.0
    %133 = vmatprep.subr.mxu0 0.0
    %134 = vmatpush2.msra.mxu0 0.0
    %135 = vmatprep.subr.mxu0 0.0
    %136 = vmatpush2.msra.mxu0 0.0
    %137 = vmatprep.subr.mxu0 0.0
    %138 = vmatpush2.msra.mxu0 0.0
    %139 = vmatprep.subr.mxu0 0.0
    %140 = vmatpush2.msra.mxu0 0.0
    %141 = vmatprep.subr.mxu0 0.0
    %142 = vmatpush2.msra.mxu0 0.0
    %143 = vmatprep.subr.mxu0 0.0
    %144 = vmatpush2.msra.mxu0 0.0
    %145 = vmatprep.subr.mxu0 0.0
    %146 = vmatpush2.msra.mxu0 0.0
    %147 = vmatprep.subr.mxu0 0.0
    %148 = vmatpush2.msra.mxu0 0.0
    %149 = vmatprep.subr.mxu0 0.0
    %150 = vmatpush2.msra.mxu0 0.0
    %151 = vmatprep.subr.mxu0 0.0
    %152 = vmatpush2.msra.mxu0 0.0
    %153 = vmatprep.mubr.f32.mxu0 0.0
    %154 = vmatmul.mubr.f32.gmra.mxu0 %v80
    %v155 = vpop.f32.mrf.mxu0
    %v156 = vadd.f32 %v76, %v155
    %v157 = vpop.f32.mrf.mxu0
    %158 = vmatprep.mubr.f32.mxu0 0.0
    %159 = vmatmul.mubr.f32.gmra.mxu0 %v83
    %v160 = vpop.f32.mrf.mxu0
    %v161 = vadd.f32 %v76, %v160
    %v162 = vpop.f32.mrf.mxu0
    %163 = vdwg.mxu0
    %v164 = vmax.f32 %v156, 0.0
    %v165 = vmax.f32 %v161, 0.0
    %v166 = vld [vmem:[%s3] sm:$0xff]
    %v167 = vld [vmem:[%s3 + $0x8] sm:$0xff]
    %v168 = vld [vmem:[%s3 + $0x10] sm:$0xff]
    %v169 = vld [vmem:[%s3 + $0x18] sm:$0xff]
    %v170 = vld [vmem:[%s3 + $0x20] sm:$0xff]
    %v171 = vld [vmem:[%s3 + $0x28] sm:$0xff]
    %v172 = vld [vmem:[%s3 + $0x30] sm:$0xff]
    %v173 = vld [vmem:[%s3 + $0x38] sm:$0xff]
    %v174 = vld [vmem:[%s3 + $0x40] sm:$0xff]
    %v175 = vld [vmem:[%s3 + $0x48] sm:$0xff]
    %v176 = vld [vmem:[%s3 + $0x50] sm:$0xff]
    %v177 = vld [vmem:[%s3 + $0x58] sm:$0xff]
    %v178 = vld [vmem:[%s3 + $0x60] sm:$0xff]
    %v179 = vld [vmem:[%s3 + $0x68] sm:$0xff]
    %v180 = vld [vmem:[%s3 + $0x70] sm:$0xff]
    %v181 = vld [vmem:[%s3 + $0x78] sm:$0xff]
    %v182 = vld [vmem:[%s4] sm:$0x1]
    %v184 = vlaneseq
    %v185 = vshrl.u32 %v184, 7
    %v186 = vsub.s32 0, %v185
    %v187 = vrot.slane %v182, %v186
    %189 = vmatprep.subr.mxu0 0.0
    %190 = vmatpush1.msra.mxu0 %v181
    %191 = vmatprep.subr.mxu0 0.0
    %192 = vmatpush1.msra.mxu0 %v180
    %193 = vmatprep.subr.mxu0 0.0
    %194 = vmatpush1.msra.mxu0 %v179
    %195 = vmatprep.subr.mxu0 0.0
    %196 = vmatpush1.msra.mxu0 %v178
    %197 = vmatprep.subr.mxu0 0.0
    %198 = vmatpush1.msra.mxu0 %v177
    %199 = vmatprep.subr.mxu0 0.0
    %200 = vmatpush1.msra.mxu0 %v176
    %201 = vmatprep.subr.mxu0 0.0
    %202 = vmatpush1.msra.mxu0 %v175
    %203 = vmatprep.subr.mxu0 0.0
    %204 = vmatpush1.msra.mxu0 %v174
    %205 = vmatprep.subr.mxu0 0.0
    %206 = vmatpush1.msra.mxu0 %v173
    %207 = vmatprep.subr.mxu0 0.0
    %208 = vmatpush1.msra.mxu0 %v172
    %209 = vmatprep.subr.mxu0 0.0
    %210 = vmatpush1.msra.mxu0 %v171
    %211 = vmatprep.subr.mxu0 0.0
    %212 = vmatpush1.msra.mxu0 %v170
    %213 = vmatprep.subr.mxu0 0.0
    %214 = vmatpush1.msra.mxu0 %v169
    %215 = vmatprep.subr.mxu0 0.0
    %216 = vmatpush1.msra.mxu0 %v168
    %217 = vmatprep.subr.mxu0 0.0
    %218 = vmatpush1.msra.mxu0 %v167
    %219 = vmatprep.subr.mxu0 0.0
    %220 = vmatpush1.msra.mxu0 %v166
    %221 = vmatprep.subr.mxu0 0.0
    %222 = vmatpush2.msra.mxu0 0.0
    %223 = vmatprep.subr.mxu0 0.0
    %224 = vmatpush2.msra.mxu0 0.0
    %225 = vmatprep.subr.mxu0 0.0
    %226 = vmatpush2.msra.mxu0 0.0
    %227 = vmatprep.subr.mxu0 0.0
    %228 = vmatpush2.msra.mxu0 0.0
    %229 = vmatprep.subr.mxu0 0.0
    %230 = vmatpush2.msra.mxu0 0.0
    %231 = vmatprep.subr.mxu0 0.0
    %232 = vmatpush2.msra.mxu0 0.0
    %233 = vmatprep.subr.mxu0 0.0
    %234 = vmatpush2.msra.mxu0 0.0
    %235 = vmatprep.subr.mxu0 0.0
    %236 = vmatpush2.msra.mxu0 0.0
    %237 = vmatprep.subr.mxu0 0.0
    %238 = vmatpush2.msra.mxu0 0.0
    %239 = vmatprep.subr.mxu0 0.0
    %240 = vmatpush2.msra.mxu0 0.0
    %241 = vmatprep.subr.mxu0 0.0
    %242 = vmatpush2.msra.mxu0 0.0
    %243 = vmatprep.subr.mxu0 0.0
    %244 = vmatpush2.msra.mxu0 0.0
    %245 = vmatprep.subr.mxu0 0.0
    %246 = vmatpush2.msra.mxu0 0.0
    %247 = vmatprep.subr.mxu0 0.0
    %248 = vmatpush2.msra.mxu0 0.0
    %249 = vmatprep.subr.mxu0 0.0
    %250 = vmatpush2.msra.mxu0 0.0
    %251 = vmatprep.subr.mxu0 0.0
    %252 = vmatpush2.msra.mxu0 0.0
    %253 = vmatprep.mubr.f32.mxu0 0.0
    %254 = vmatmul.mubr.f32.gmra.mxu0 %v164
    %v255 = vpop.f32.mrf.mxu0
    %v256 = vadd.f32 %v187, %v255
    %v257 = vpop.f32.mrf.mxu0
    %258 = vmatprep.mubr.f32.mxu0 0.0
    %259 = vmatmul.mubr.f32.gmra.mxu0 %v165
    %v260 = vpop.f32.mrf.mxu0
    %v261 = vadd.f32 %v187, %v260
    %v262 = vpop.f32.mrf.mxu0
    %263 = vdwg.mxu0
    %v264 = vmax.f32 %v256, 0.0
    %v265 = vmax.f32 %v261, 0.0
    %v266 = vld [vmem:[#allocation5] sm:$0xff]
    %v267 = vld [vmem:[#allocation5 + $0x8] sm:$0xff]
    %v268 = vld [vmem:[#allocation5 + $0x10] sm:$0xff]
    %v269 = vld [vmem:[#allocation5 + $0x18] sm:$0xff]
    %v270 = vld [vmem:[#allocation5 + $0x20] sm:$0xff]
    %v271 = vld [vmem:[#allocation5 + $0x28] sm:$0xff]
    %v272 = vld [vmem:[#allocation5 + $0x30] sm:$0xff]
    %v273 = vld [vmem:[#allocation5 + $0x38] sm:$0xff]
    %v274 = vld [vmem:[#allocation5 + $0x40] sm:$0xff]
    %v275 = vld [vmem:[#allocation5 + $0x48] sm:$0xff]
    %v276 = vld [vmem:[#allocation5 + $0x50] sm:$0xff]
    %v277 = vld [vmem:[#allocation5 + $0x58] sm:$0xff]
    %v278 = vld [vmem:[#allocation5 + $0x60] sm:$0xff]
    %v279 = vld [vmem:[#allocation5 + $0x68] sm:$0xff]
    %v280 = vld [vmem:[#allocation5 + $0x70] sm:$0xff]
    %v281 = vld [vmem:[#allocation5 + $0x78] sm:$0xff]
    %v282 = vld [vmem:[%s6] sm:$0x1]
    %v284 = vlaneseq
    %v285 = vshrl.u32 %v284, 7
    %v286 = vsub.s32 0, %v285
    %v287 = vrot.slane %v282, %v286
    %289 = vmatprep.subr.mxu0 0.0
    %290 = vmatpush1.msra.mxu0 %v281
    %291 = vmatprep.subr.mxu0 0.0
    %292 = vmatpush1.msra.mxu0 %v280
    %293 = vmatprep.subr.mxu0 0.0
    %294 = vmatpush1.msra.mxu0 %v279
    %295 = vmatprep.subr.mxu0 0.0
    %296 = vmatpush1.msra.mxu0 %v278
    %297 = vmatprep.subr.mxu0 0.0
    %298 = vmatpush1.msra.mxu0 %v277
    %299 = vmatprep.subr.mxu0 0.0
    %300 = vmatpush1.msra.mxu0 %v276
    %301 = vmatprep.subr.mxu0 0.0
    %302 = vmatpush1.msra.mxu0 %v275
    %303 = vmatprep.subr.mxu0 0.0
    %304 = vmatpush1.msra.mxu0 %v274
    %305 = vmatprep.subr.mxu0 0.0
    %306 = vmatpush1.msra.mxu0 %v273
    %307 = vmatprep.subr.mxu0 0.0
    %308 = vmatpush1.msra.mxu0 %v272
    %309 = vmatprep.subr.mxu0 0.0
    %310 = vmatpush1.msra.mxu0 %v271
    %311 = vmatprep.subr.mxu0 0.0
    %312 = vmatpush1.msra.mxu0 %v270
    %313 = vmatprep.subr.mxu0 0.0
    %314 = vmatpush1.msra.mxu0 %v269
    %315 = vmatprep.subr.mxu0 0.0
    %316 = vmatpush1.msra.mxu0 %v268
    %317 = vmatprep.subr.mxu0 0.0
    %318 = vmatpush1.msra.mxu0 %v267
    %319 = vmatprep.subr.mxu0 0.0
    %320 = vmatpush1.msra.mxu0 %v266
    %321 = vmatprep.subr.mxu0 0.0
    %322 = vmatpush2.msra.mxu0 0.0
    %323 = vmatprep.subr.mxu0 0.0
    %324 = vmatpush2.msra.mxu0 0.0
    %325 = vmatprep.subr.mxu0 0.0
    %326 = vmatpush2.msra.mxu0 0.0
    %327 = vmatprep.subr.mxu0 0.0
    %328 = vmatpush2.msra.mxu0 0.0
    %329 = vmatprep.subr.mxu0 0.0
    %330 = vmatpush2.msra.mxu0 0.0
    %331 = vmatprep.subr.mxu0 0.0
    %332 = vmatpush2.msra.mxu0 0.0
    %333 = vmatprep.subr.mxu0 0.0
    %334 = vmatpush2.msra.mxu0 0.0
    %335 = vmatprep.subr.mxu0 0.0
    %336 = vmatpush2.msra.mxu0 0.0
    %337 = vmatprep.subr.mxu0 0.0
    %338 = vmatpush2.msra.mxu0 0.0
    %339 = vmatprep.subr.mxu0 0.0
    %340 = vmatpush2.msra.mxu0 0.0
    %341 = vmatprep.subr.mxu0 0.0
    %342 = vmatpush2.msra.mxu0 0.0
    %343 = vmatprep.subr.mxu0 0.0
    %344 = vmatpush2.msra.mxu0 0.0
    %345 = vmatprep.subr.mxu0 0.0
    %346 = vmatpush2.msra.mxu0 0.0
    %347 = vmatprep.subr.mxu0 0.0
    %348 = vmatpush2.msra.mxu0 0.0
    %349 = vmatprep.subr.mxu0 0.0
    %350 = vmatpush2.msra.mxu0 0.0
    %351 = vmatprep.subr.mxu0 0.0
    %352 = vmatpush2.msra.mxu0 0.0
    %353 = vmatprep.mubr.f32.mxu0 0.0
    %354 = vmatmul.mubr.f32.gmra.mxu0 %v264
    %v355 = vpop.f32.mrf.mxu0
    %v356 = vadd.f32 %v287, %v355
    %v357 = vpop.f32.mrf.mxu0
    %358 = vmatprep.mubr.f32.mxu0 0.0
    %359 = vmatmul.mubr.f32.gmra.mxu0 %v265
    %v360 = vpop.f32.mrf.mxu0
    %v361 = vadd.f32 %v287, %v360
    %v362 = vpop.f32.mrf.mxu0
    %363 = vdwg.mxu0
    %v364 = vmax.f32 %v356, 0.0
    %v365 = vmax.f32 %v361, 0.0
    %v366 = vld [vmem:[%s7] sm:$0xff]
    %v367 = vld [vmem:[%s7 + $0x8] sm:$0xff]
    %v368 = vld [vmem:[%s7 + $0x10] sm:$0xff]
    %v369 = vld [vmem:[%s7 + $0x18] sm:$0xff]
    %v370 = vld [vmem:[%s7 + $0x20] sm:$0xff]
    %v371 = vld [vmem:[%s7 + $0x28] sm:$0xff]
    %v372 = vld [vmem:[%s7 + $0x30] sm:$0xff]
    %v373 = vld [vmem:[%s7 + $0x38] sm:$0xff]
    %v374 = vld [vmem:[%s7 + $0x40] sm:$0xff]
    %v375 = vld [vmem:[%s7 + $0x48] sm:$0xff]
    %v376 = vld [vmem:[%s7 + $0x50] sm:$0xff]
    %v377 = vld [vmem:[%s7 + $0x58] sm:$0xff]
    %v378 = vld [vmem:[%s7 + $0x60] sm:$0xff]
    %v379 = vld [vmem:[%s7 + $0x68] sm:$0xff]
    %v380 = vld [vmem:[%s7 + $0x70] sm:$0xff]
    %v381 = vld [vmem:[%s7 + $0x78] sm:$0xff]
    %v382 = vld [vmem:[%s8] sm:$0x1]
    %v384 = vlaneseq
    %v385 = vshrl.u32 %v384, 7
    %v386 = vsub.s32 0, %v385
    %v387 = vrot.slane %v382, %v386
    %389 = vmatprep.subr.mxu0 0.0
    %390 = vmatpush1.msra.mxu0 %v381
    %391 = vmatprep.subr.mxu0 0.0
    %392 = vmatpush1.msra.mxu0 %v380
    %393 = vmatprep.subr.mxu0 0.0
    %394 = vmatpush1.msra.mxu0 %v379
    %395 = vmatprep.subr.mxu0 0.0
    %396 = vmatpush1.msra.mxu0 %v378
    %397 = vmatprep.subr.mxu0 0.0
    %398 = vmatpush1.msra.mxu0 %v377
    %399 = vmatprep.subr.mxu0 0.0
    %400 = vmatpush1.msra.mxu0 %v376
    %401 = vmatprep.subr.mxu0 0.0
    %402 = vmatpush1.msra.mxu0 %v375
    %403 = vmatprep.subr.mxu0 0.0
    %404 = vmatpush1.msra.mxu0 %v374
    %405 = vmatprep.subr.mxu0 0.0
    %406 = vmatpush1.msra.mxu0 %v373
    %407 = vmatprep.subr.mxu0 0.0
    %408 = vmatpush1.msra.mxu0 %v372
    %409 = vmatprep.subr.mxu0 0.0
    %410 = vmatpush1.msra.mxu0 %v371
    %411 = vmatprep.subr.mxu0 0.0
    %412 = vmatpush1.msra.mxu0 %v370
    %413 = vmatprep.subr.mxu0 0.0
    %414 = vmatpush1.msra.mxu0 %v369
    %415 = vmatprep.subr.mxu0 0.0
    %416 = vmatpush1.msra.mxu0 %v368
    %417 = vmatprep.subr.mxu0 0.0
    %418 = vmatpush1.msra.mxu0 %v367
    %419 = vmatprep.subr.mxu0 0.0
    %420 = vmatpush1.msra.mxu0 %v366
    %421 = vmatprep.subr.mxu0 0.0
    %422 = vmatpush2.msra.mxu0 0.0
    %423 = vmatprep.subr.mxu0 0.0
    %424 = vmatpush2.msra.mxu0 0.0
    %425 = vmatprep.subr.mxu0 0.0
    %426 = vmatpush2.msra.mxu0 0.0
    %427 = vmatprep.subr.mxu0 0.0
    %428 = vmatpush2.msra.mxu0 0.0
    %429 = vmatprep.subr.mxu0 0.0
    %430 = vmatpush2.msra.mxu0 0.0
    %431 = vmatprep.subr.mxu0 0.0
    %432 = vmatpush2.msra.mxu0 0.0
    %433 = vmatprep.subr.mxu0 0.0
    %434 = vmatpush2.msra.mxu0 0.0
    %435 = vmatprep.subr.mxu0 0.0
    %436 = vmatpush2.msra.mxu0 0.0
    %437 = vmatprep.subr.mxu0 0.0
    %438 = vmatpush2.msra.mxu0 0.0
    %439 = vmatprep.subr.mxu0 0.0
    %440 = vmatpush2.msra.mxu0 0.0
    %441 = vmatprep.subr.mxu0 0.0
    %442 = vmatpush2.msra.mxu0 0.0
    %443 = vmatprep.subr.mxu0 0.0
    %444 = vmatpush2.msra.mxu0 0.0
    %445 = vmatprep.subr.mxu0 0.0
    %446 = vmatpush2.msra.mxu0 0.0
    %447 = vmatprep.subr.mxu0 0.0
    %448 = vmatpush2.msra.mxu0 0.0
    %449 = vmatprep.subr.mxu0 0.0
    %450 = vmatpush2.msra.mxu0 0.0
    %451 = vmatprep.subr.mxu0 0.0
    %452 = vmatpush2.msra.mxu0 0.0
    %453 = vmatprep.mubr.f32.mxu0 0.0
    %454 = vmatmul.mubr.f32.gmra.mxu0 %v364
    %v455 = vpop.f32.mrf.mxu0
    %v456 = vadd.f32 %v387, %v455
    %v457 = vpop.f32.mrf.mxu0
    %458 = vmatprep.mubr.f32.mxu0 0.0
    %459 = vmatmul.mubr.f32.gmra.mxu0 %v365
    %v460 = vpop.f32.mrf.mxu0
    %v461 = vadd.f32 %v387, %v460
    %v462 = vpop.f32.mrf.mxu0
    %463 = vdwg.mxu0
    %vm464 = vcmask 80896
    %465 = vst.msk [vmem:[#allocation7] sm:$0xff] %vm464, %v456
    %466 = vst.msk [vmem:[#allocation7 + $0x8] sm:$0xff] %vm464, %v461
    // Predicated region
    $region46: #{tpu_custom_call.1} parent=1 // pred_check
      _
    $region47: #{tpu_custom_call.1} parent=1 // pred_check_branch
      %468 = sbr.rel (0) target = $region49
    $region48: #{tpu_custom_call.1} parent=1 // pred_region
      %s470 = ssub.s32 256, 256
      %471 = vsyncadd [#allocation4], %s470
      %s472 = sshll.u32 [#allocation7], 4
      %s473 = int_to_ptr.vmem [resolvable:$true] %s472
      %478 = dma.vmem_to_hbm [thread:$0]  %s473, 256, %s9, [#allocation4], 128, 128, 8
    $region49: #{tpu_custom_call.1} parent=1 // pred_fallthru
      _
    // Predicated region
    $region50: #{tpu_custom_call.1} parent=1 // pred_check
      _
    $region51: #{tpu_custom_call.1} parent=1 // pred_check_branch
      %480 = sbr.rel (0) target = $region53
    $region52: #{tpu_custom_call.1} parent=1 // pred_region
      %481 = dma.done [#allocation4], 256
    $region53: #{tpu_custom_call.1} parent=1 // pred_fallthru
      _
    %482 = vsyncpa [#allocation3], 1
    %483 = vsyncpa [#allocation6], 1
    %484 = vsyncpa [#allocation4], 1

</llo_original>
